<compile_context>
chip_gen: v6e
topology: v6e:2x2x1
jax: 0.10.0
libtpu: 0.0.40
codegen_flags: <defaults>
</compile_context>

<pallas_src>
import functools

import jax
import jax.numpy as jnp
from jax.experimental import pallas as pl
from jax.experimental.pallas import tpu as pltpu


# --------------------------------------------------------------------------- #
# Kernel
# --------------------------------------------------------------------------- #
def _coupling_kernel(x1_ref, x2_ref, *refs, hidden, reverse):
    """refs = (W0, b0, W1, b1, ..., W_out, b_out, y2_out_ref).

    Weights are in the (possibly bf16) compute dtype; biases are f32.
    All matmuls accumulate in f32 on the MXU; epilogue (bias, ReLU, add) is f32.
    """
    param_refs = refs[:-1]
    y2_ref = refs[-1]
    compute_dtype = param_refs[0].dtype

    h = x1_ref[...].astype(compute_dtype)
    # `hidden` Linear+ReLU layers (statically unrolled at trace time)
    for i in range(hidden):
        w = param_refs[2 * i][...]
        b = param_refs[2 * i + 1][...]              # (1, mid_pad) f32, broadcasts
        h = jnp.dot(h, w, preferred_element_type=jnp.float32) + b
        h = jnp.maximum(h, 0.0).astype(compute_dtype)
    # final Linear
    w_out = param_refs[2 * hidden][...]
    b_out = param_refs[2 * hidden + 1][...]
    m = jnp.dot(h, w_out, preferred_element_type=jnp.float32) + b_out

    x2 = x2_ref[...].astype(jnp.float32)
    y2 = x2 - m if reverse else x2 + m              # sign folded at trace time
    y2_ref[...] = y2.astype(y2_ref.dtype)


# --------------------------------------------------------------------------- #
# Parameter preparation (run once at model init, not per forward)
# --------------------------------------------------------------------------- #
def _round_up(n, m):
    return (n + m - 1) // m * m


def prepare_params(params, compute_dtype=jnp.bfloat16):
    """Pad every (W, b) to lane-dense multiples of 128 and cast W for the MXU.

    Zero padding is exact: padded hidden units stay 0 through bias(=0)+ReLU and
    padded output columns produce 0, which the wrapper slices off.
    """
    prepared = []
    for w, b in params:
        fi, fo = w.shape
        fi_p, fo_p = _round_up(fi, 128), _round_up(fo, 128)
        wp = jnp.pad(w.astype(compute_dtype), ((0, fi_p - fi), (0, fo_p - fo)))
        bp = jnp.pad(b.astype(jnp.float32), ((0, 0), (0, fo_p - b.shape[1])))
        prepared.append((wp, bp))
    return prepared


def _resident_spec(shape):
    # Weights/biases: block index never changes -> pipeliner fetches once.
    # Single buffering halves the weight VMEM footprint (matters on v7x at
    # mid_dim~1000, hidden~5); fall back to default double-buffer if the
    # installed JAX rejects pipeline_mode.
    try:
        return pl.BlockSpec(shape, lambda i: (0, 0), pipeline_mode=pl.Buffered(1))
    except Exception:
        return pl.BlockSpec(shape, lambda i: (0, 0))


# --------------------------------------------------------------------------- #
# Deinterleaved (x1, x2) entry point -- use this across a stacked NICE model
# --------------------------------------------------------------------------- #
def additive_coupling_halves(x1, x2, prepared_params, *, reverse=False,
                             batch_tile=None):
    """y1 = x1 (pass-through), y2 = x2 +/- mlp(x1), both shape (B, half)."""
    B, half = x1.shape
    hidden = len(prepared_params) - 1
    half_pad = prepared_params[0][0].shape[0]       # fan_in of first layer (padded)

    # Pad activations to the padded feature width (weights already padded).
    if half_pad != half:
        pad = half_pad - half
        x1p = jnp.pad(x1, ((0, 0), (0, pad)))
        x2p = jnp.pad(x2, ((0, 0), (0, pad)))
    else:
        x1p, x2p = x1, x2

    # Batch tiling: >=128 rows amortize per-step overhead and feed the MXU;
    # v6e/v5e (128 MiB VMEM) can go 512+, v7x (64 MiB) prefer 256.
    if batch_tile is None:
        batch_tile = 256
    TB = min(batch_tile, B)
    if TB != B and TB % 8 != 0:
        TB = B  # keep the (8, 128) block-shape constraint satisfied

    in_specs = [
        pl.BlockSpec((TB, half_pad), lambda i: (i, 0)),   # x1 batch tile
        pl.BlockSpec((TB, half_pad), lambda i: (i, 0)),   # x2 batch tile
    ]
    flat_params = []
    for wp, bp in prepared_params:
        flat_params.extend([wp, bp])
        in_specs.append(_resident_spec(wp.shape))
        in_specs.append(_resident_spec(bp.shape))

    y2p = pl.pallas_call(
        functools.partial(_coupling_kernel, hidden=hidden, reverse=reverse),
        out_shape=jax.ShapeDtypeStruct((B, half_pad), x2p.dtype),
        grid=(pl.cdiv(B, TB),),
        in_specs=in_specs,
        out_specs=pl.BlockSpec((TB, half_pad), lambda i: (i, 0)),
        input_output_aliases={1: 0},                 # y2 reuses x2's buffer
        compiler_params=pltpu.CompilerParams(
            dimension_semantics=("parallel",),
            vmem_limit_bytes=48 * 1024 * 1024,       # safe on v5e/v6e/v7x
        ),
    )(x1p, x2p, *flat_params)

    y2 = y2p[:, :half] if half_pad != half else y2p
    return x1, y2


# --------------------------------------------------------------------------- #
# Module-equivalent forward (interleaved (B, D) interface, as in the nn.Module)
# --------------------------------------------------------------------------- #
@functools.partial(jax.jit, static_argnames=("mask_config", "reverse", "batch_tile"))
def additive_coupling_forward(x, log_det_J, prepared_params, *, mask_config,
                              reverse=False, batch_tile=None):
    B, D = x.shape
    # One-time stride-2 split / interleave at the module boundary.  For a full
    # NICE stack, keep (x1, x2) deinterleaved across layers and call
    # additive_coupling_halves directly to avoid this extra pass per layer.
    x1 = x[:, mask_config::2]
    x2 = x[:, 1 - mask_config::2]

    y1, y2 = additive_coupling_halves(x1, x2, prepared_params,
                                      reverse=reverse, batch_tile=batch_tile)

    ordered = (y1, y2) if mask_config == 0 else (y2, y1)
    y = jnp.stack(ordered, axis=2).reshape(B, D)
    return y, log_det_J


# ------------------------ pure-JAX reference for checking ------------------- #
def _reference_forward(x, log_det_J, params, *, mask_config, reverse=False):
    x1 = x[:, mask_config::2]
    x2 = x[:, 1 - mask_config::2]
    h = x1
    for (w, b) in params[:-1]:
        h = jnp.maximum(h @ w + b, 0.0)
    m = h @ params[-1][0] + params[-1][1]
    y2 = x2 - m if reverse else x2 + m
    ordered = [x1, y2] if mask_config == 0 else [y2, x1]
    y = jnp.stack(ordered, axis=2).reshape(x.shape[0], x.shape[1])
    return y, log_det_J


def _init_params(key, in_out_dim, mid_dim, hidden, dtype=jnp.float32):
    """Deterministic nn.Linear-style init (uniform +/- 1/sqrt(fan_in))."""
    params = []
    dims = [in_out_dim // 2] + [mid_dim] * hidden + [in_out_dim // 2]
    for i in range(hidden + 1):
        key, kw, kb = jax.random.split(key, 3)
        bound = 1.0 / (dims[i] ** 0.5)
        w = jax.random.uniform(kw, (dims[i], dims[i + 1]), dtype, -bound, bound)
        b = jax.random.uniform(kb, (1, dims[i + 1]), dtype, -bound, bound)
        params.append((w, b))
    return params


if __name__ == "__main__":
    # Small shapes consistent with the module; batch_tile=8 -> grid of 2 steps.
    B = 16
    in_out_dim = 64
    mid_dim = 32
    hidden = 2
    mask_config = 1
    batch_tile = 8

    key = jax.random.PRNGKey(0)
    kx, kp = jax.random.split(key)
    x = jax.random.normal(kx, (B, in_out_dim), jnp.float32)
    log_det_J = jnp.zeros((), jnp.float32)
    params = _init_params(kp, in_out_dim, mid_dim, hidden)
    y_ref, ldj_ref = _reference_forward(
        x, log_det_J, params, mask_config=mask_config, reverse=False
    )

    # --- tight check: f32 compute path (same numerics as the PyTorch module) ---
    params_f32 = prepare_params(params, compute_dtype=jnp.float32)
    y32, ldj32 = additive_coupling_forward(
        x, log_det_J, params_f32, mask_config=mask_config,
        reverse=False, batch_tile=batch_tile
    )
    y32 = jax.block_until_ready(y32)
    assert jnp.allclose(y32, y_ref, atol=1e-4, rtol=1e-4), "f32 mismatch vs reference"
    assert jnp.allclose(ldj32, ldj_ref), "log_det_J should pass through unchanged"

    # --- fast path: bf16 matmul chain (MXU fast path), f32 accumulate/epilogue ---
    params_bf16 = prepare_params(params, compute_dtype=jnp.bfloat16)
    y, ldj = additive_coupling_forward(
        x, log_det_J, params_bf16, mask_config=mask_config,
        reverse=False, batch_tile=batch_tile
    )
    y = jax.block_until_ready(y)
    assert jnp.allclose(y, y_ref, atol=5e-2, rtol=5e-2), "bf16 drifted vs reference"

    # --- reverse (inference) direction round-trips back to x ---
    x_rec, _ = additive_coupling_forward(
        y, ldj, params_bf16, mask_config=mask_config,
        reverse=True, batch_tile=batch_tile
    )
    x_rec = jax.block_until_ready(x_rec)
    assert jnp.allclose(x_rec, x, atol=1e-4, rtol=1e-4), "inverse round-trip failed"

    print("KERNEL_OK")
</pallas_src>

<mosaic_0001>
module attributes {stable_mosaic.version = 11 : i64} {
  func.func @_coupling_kernel(%arg0: i32, %arg1: memref<8x128xf32, #tpu.memory_space<vmem>>, %arg2: memref<8x128xf32, #tpu.memory_space<vmem>>, %arg3: memref<128x128xf32, #tpu.memory_space<vmem>>, %arg4: memref<1x128xf32, #tpu.memory_space<vmem>>, %arg5: memref<128x128xf32, #tpu.memory_space<vmem>>, %arg6: memref<1x128xf32, #tpu.memory_space<vmem>>, %arg7: memref<128x128xf32, #tpu.memory_space<vmem>>, %arg8: memref<1x128xf32, #tpu.memory_space<vmem>>, %arg9: memref<8x128xf32, #tpu.memory_space<vmem>>) attributes {dimension_semantics = [#tpu.dimension_semantics<parallel>], iteration_bounds = array<i64: 2>, scalar_prefetch = 0 : i64, scratch_operands = 0 : i64, tpu.core_type = #tpu.core_type<tc>, window_params = [{transform_indices = @transform_0, window_bounds = array<i64: 8, 128>}, {transform_indices = @transform_1, window_bounds = array<i64: 8, 128>}, {pipeline_mode = #tpu.pipeline_mode<synchronous>, transform_indices = @transform_2, window_bounds = array<i64: 128, 128>}, {pipeline_mode = #tpu.pipeline_mode<synchronous>, transform_indices = @transform_3, window_bounds = array<i64: 1, 128>}, {pipeline_mode = #tpu.pipeline_mode<synchronous>, transform_indices = @transform_4, window_bounds = array<i64: 128, 128>}, {pipeline_mode = #tpu.pipeline_mode<synchronous>, transform_indices = @transform_5, window_bounds = array<i64: 1, 128>}, {pipeline_mode = #tpu.pipeline_mode<synchronous>, transform_indices = @transform_6, window_bounds = array<i64: 128, 128>}, {pipeline_mode = #tpu.pipeline_mode<synchronous>, transform_indices = @transform_7, window_bounds = array<i64: 1, 128>}, {transform_indices = @transform_8, window_bounds = array<i64: 8, 128>}]} {
    %c0 = arith.constant 0 : index
    %c0_0 = arith.constant 0 : index
    %0 = vector.load %arg1[%c0, %c0_0] : memref<8x128xf32, #tpu.memory_space<vmem>>, vector<8x128xf32>
    %c0_1 = arith.constant 0 : index
    %c0_2 = arith.constant 0 : index
    %1 = vector.load %arg3[%c0_1, %c0_2] : memref<128x128xf32, #tpu.memory_space<vmem>>, vector<128x128xf32>
    %c0_3 = arith.constant 0 : index
    %c0_4 = arith.constant 0 : index
    %2 = vector.load %arg4[%c0_3, %c0_4] : memref<1x128xf32, #tpu.memory_space<vmem>>, vector<1x128xf32>
    %cst = arith.constant dense<0.000000e+00> : vector<8x128xf32>
    %3 = tpu.matmul %0, %1, %cst {dimension_numbers = #tpu.dot_dimension_numbers<[1], [0], [0], [1], [0, 0, 1, 1], [], []>} : vector<8x128xf32>, vector<128x128xf32>, vector<8x128xf32> -> vector<8x128xf32>
    %4 = vector.broadcast %2 : vector<1x128xf32> to vector<8x128xf32>
    %5 = arith.addf %3, %4 : vector<8x128xf32>
    %cst_5 = arith.constant 0.000000e+00 : f32
    %6 = vector.broadcast %cst_5 : f32 to vector<8x128xf32>
    %7 = arith.maximumf %5, %6 : vector<8x128xf32>
    %c0_6 = arith.constant 0 : index
    %c0_7 = arith.constant 0 : index
    %8 = vector.load %arg5[%c0_6, %c0_7] : memref<128x128xf32, #tpu.memory_space<vmem>>, vector<128x128xf32>
    %c0_8 = arith.constant 0 : index
    %c0_9 = arith.constant 0 : index
    %9 = vector.load %arg6[%c0_8, %c0_9] : memref<1x128xf32, #tpu.memory_space<vmem>>, vector<1x128xf32>
    %cst_10 = arith.constant dense<0.000000e+00> : vector<8x128xf32>
    %10 = tpu.matmul %7, %8, %cst_10 {dimension_numbers = #tpu.dot_dimension_numbers<[1], [0], [0], [1], [0, 0, 1, 1], [], []>} : vector<8x128xf32>, vector<128x128xf32>, vector<8x128xf32> -> vector<8x128xf32>
    %11 = vector.broadcast %9 : vector<1x128xf32> to vector<8x128xf32>
    %12 = arith.addf %10, %11 : vector<8x128xf32>
    %cst_11 = arith.constant 0.000000e+00 : f32
    %13 = vector.broadcast %cst_11 : f32 to vector<8x128xf32>
    %14 = arith.maximumf %12, %13 : vector<8x128xf32>
    %c0_12 = arith.constant 0 : index
    %c0_13 = arith.constant 0 : index
    %15 = vector.load %arg7[%c0_12, %c0_13] : memref<128x128xf32, #tpu.memory_space<vmem>>, vector<128x128xf32>
    %c0_14 = arith.constant 0 : index
    %c0_15 = arith.constant 0 : index
    %16 = vector.load %arg8[%c0_14, %c0_15] : memref<1x128xf32, #tpu.memory_space<vmem>>, vector<1x128xf32>
    %cst_16 = arith.constant dense<0.000000e+00> : vector<8x128xf32>
    %17 = tpu.matmul %14, %15, %cst_16 {dimension_numbers = #tpu.dot_dimension_numbers<[1], [0], [0], [1], [0, 0, 1, 1], [], []>} : vector<8x128xf32>, vector<128x128xf32>, vector<8x128xf32> -> vector<8x128xf32>
    %18 = vector.broadcast %16 : vector<1x128xf32> to vector<8x128xf32>
    %19 = arith.addf %17, %18 : vector<8x128xf32>
    %c0_17 = arith.constant 0 : index
    %c0_18 = arith.constant 0 : index
    %20 = vector.load %arg2[%c0_17, %c0_18] : memref<8x128xf32, #tpu.memory_space<vmem>>, vector<8x128xf32>
    %21 = arith.addf %20, %19 : vector<8x128xf32>
    %c0_19 = arith.constant 0 : index
    %c0_20 = arith.constant 0 : index
    %22 = vector.load %arg9[%c0_19, %c0_20] : memref<8x128xf32, #tpu.memory_space<vmem>>, vector<8x128xf32>
    tpu.vector_store %arg9[%c0_19, %c0_20], %21 {strides = array<i32>} : memref<8x128xf32, #tpu.memory_space<vmem>>, vector<8x128xf32>,
    return
  }
  func.func @transform_0(%arg0: i32) -> (i32, i32) {
    %c0_i32 = arith.constant 0 : i32
    %c0_i32_0 = arith.constant 0 : i32
    return %arg0, %c0_i32 : i32, i32
  }
  func.func @transform_1(%arg0: i32) -> (i32, i32) {
    %c0_i32 = arith.constant 0 : i32
    %c0_i32_0 = arith.constant 0 : i32
    return %arg0, %c0_i32 : i32, i32
  }
  func.func @transform_2(%arg0: i32) -> (i32, i32) {
    %c0_i32 = arith.constant 0 : i32
    %c0_i32_0 = arith.constant 0 : i32
    %c0_i32_1 = arith.constant 0 : i32
    return %c0_i32, %c0_i32_0 : i32, i32
  }
  func.func @transform_3(%arg0: i32) -> (i32, i32) {
    %c0_i32 = arith.constant 0 : i32
    %c0_i32_0 = arith.constant 0 : i32
    %c0_i32_1 = arith.constant 0 : i32
    return %c0_i32, %c0_i32_0 : i32, i32
  }
  func.func @transform_4(%arg0: i32) -> (i32, i32) {
    %c0_i32 = arith.constant 0 : i32
    %c0_i32_0 = arith.constant 0 : i32
    %c0_i32_1 = arith.constant 0 : i32
    return %c0_i32, %c0_i32_0 : i32, i32
  }
  func.func @transform_5(%arg0: i32) -> (i32, i32) {
    %c0_i32 = arith.constant 0 : i32
    %c0_i32_0 = arith.constant 0 : i32
    %c0_i32_1 = arith.constant 0 : i32
    return %c0_i32, %c0_i32_0 : i32, i32
  }
  func.func @transform_6(%arg0: i32) -> (i32, i32) {
    %c0_i32 = arith.constant 0 : i32
    %c0_i32_0 = arith.constant 0 : i32
    %c0_i32_1 = arith.constant 0 : i32
    return %c0_i32, %c0_i32_0 : i32, i32
  }
  func.func @transform_7(%arg0: i32) -> (i32, i32) {
    %c0_i32 = arith.constant 0 : i32
    %c0_i32_0 = arith.constant 0 : i32
    %c0_i32_1 = arith.constant 0 : i32
    return %c0_i32, %c0_i32_0 : i32, i32
  }
  func.func @transform_8(%arg0: i32) -> (i32, i32) {
    %c0_i32 = arith.constant 0 : i32
    %c0_i32_0 = arith.constant 0 : i32
    return %arg0, %c0_i32 : i32, i32
  }
}

</mosaic_0001>

<llo_original>
// kernel: additive_coupling_forward.1
$region0: #{additive_coupling_forward.1}
  #allocation0 [shape = 'u32[]', space=smem, size = 0x4, offset = 0x4, fixed_abs, tag = 'smem constant byte address 0x4 - core index']
  #allocation1 [shape = 'u32[144,128]{1,0:T(1,128)}', space=vmem, size = 0x12000, scoped, tag = 'internal scratch']
  %s0 = inlined_call_operand.vmem [shape: f32[16,128], index: 0, kind: input, shape index: {}]
  %s1 = inlined_call_operand.vmem [shape: f32[16,128], index: 1, kind: input, shape index: {}, may-alias: {1,8}]
  %s2 = inlined_call_operand.vmem [shape: f32[128,128], index: 2, kind: input, shape index: {}]
  %s3 = inlined_call_operand.vmem [shape: f32[1,128], index: 3, kind: input, shape index: {}]
  %s4 = inlined_call_operand.hbm [shape: f32[128,128], index: 4, kind: input, shape index: {}]
  %s5 = inlined_call_operand.vmem [shape: f32[1,128], index: 5, kind: input, shape index: {}]
  %s6 = inlined_call_operand.hbm [shape: f32[128,128], index: 6, kind: input, shape index: {}]
  %s7 = inlined_call_operand.vmem [shape: f32[1,128], index: 7, kind: input, shape index: {}]
  %s8 = inlined_call_operand.vmem [shape: f32[16,128], index: 8, kind: output, shape index: {}, may-alias: {1,8}]
  %s9 = sld [smem:[#allocation0]]
  $region73: #{additive_coupling_forward.1} parent=0
    _
  %s11 = ssub.s32 1, %s9
  %s12 = scalar_select 0, %s11, %s9
  $region1: #{additive_coupling_forward.1} parent=0
    #allocation2 [shape = 'u8[65536]{0}', space=vmem, size = 0x10000, scoped, tag = 'input window, operand 4, single buffered']
    #allocation3 [shape = 's32[2]{0}', space=sflag, size = 0x8, scoped, tag = 'scoped memory for additive_coupling_forward.1']
    #allocation4 [shape = 'u8[65536]{0}', space=vmem, size = 0x10000, scoped, tag = 'input window, operand 6, single buffered']
    #allocation5 [shape = 's32[1]{0}', space=sflag, size = 0x4, scoped, tag = 'scoped memory for additive_coupling_forward.1']
    %13 = vsyncpa [#allocation3], 0
    %14 = vsyncpa [#allocation5], 0
    loop: start=0, step=1, limit=4
    $region2: #{additive_coupling_forward.1} parent=1 // loop_pre_header
      _
    $region3: #{additive_coupling_forward.1} parent=1 // loop_header
      %s16 = sphi 0, %s20
      %p17 = scmp.ge.s32.totalorder %s16, 4
      %s26 = sphi 0, %s28
      %s29 = sphi 0, %s26
      %s30 = sphi 0, %s29
      %s46 = sphi 0, %s30
      %s52 = sphi 0, %s54
      %s55 = sphi 0, %s52
      %s56 = sphi 0, %s55
      %s72 = sphi 0, %s56
      %s76 = sphi 0, %s76
      %s78 = sphi 0, %s76
      %s79 = sphi 0, %s78
      %s93 = sphi 0, %s79
      %s97 = sphi 0, %s97
      %s99 = sphi 0, %s97
      %s100 = sphi 0, %s99
      %s114 = sphi 0, %s100
      %s118 = sphi 0, %s118
      %s120 = sphi 0, %s118
      %s121 = sphi 0, %s120
      %s135 = sphi 0, %s121
      %s139 = sphi 0, %s139
      %s141 = sphi 0, %s139
      %s142 = sphi 0, %s141
      %s156 = sphi 0, %s142
      %s160 = sphi 0, %s160
      %s162 = sphi 0, %s160
      %s163 = sphi 0, %s162
      %s177 = sphi 0, %s163
      %s181 = sphi 0, %s181
      %s183 = sphi 0, %s181
      %s184 = sphi 0, %s183
      %s198 = sphi 0, %s184
      %s204 = sphi 0, %s206
      %s207 = sphi 0, %s204
      %s208 = sphi 0, %s207
      %s224 = sphi 0, %s208
    $region4: #{additive_coupling_forward.1} parent=1 // loop_header_branch
      %19 = sbr.rel (%p17) target = $region8
    $region5: #{additive_coupling_forward.1} parent=1 // loop_body
      %s21 = ssub.s32 %s16, 1
      %s22 = ssub.s32 %s16, 2
      %s23 = sadd.s32 %s16, 1
      %s24 = ssub.s32 %s16, %s23
      %p25 = scmp.eq.s32.totalorder %s24, 0
      %s27 = sadd.s32 %s26, 1
      %s28 = scalar_select %p25, %s26, %s27
      %p31 = pneg %p25
      %p32 = scmp.eq.s32.totalorder %s16, 1
      %p33 = por %p31, %p32
      %p34 = scmp.ne.s32.totalorder %s26, %s29
      %p35 = scmp.eq.s32.totalorder %s16, 0
      %p36 = por %p34, %p35
      %p37 = scmp.ne.s32.totalorder %s26, %s29
      %p38 = scmp.eq.s32.totalorder %s21, 1
      %p39 = por %p37, %p38
      %p40 = scmp.ne.s32.totalorder %s29, %s30
      %p41 = scmp.eq.s32.totalorder %s21, 0
      %p42 = por %p40, %p41
      %p43 = scmp.ne.s32.totalorder %s29, %s30
      %p44 = scmp.eq.s32.totalorder %s22, 1
      %p45 = por %p43, %p44
      %p47 = scmp.ne.s32.totalorder %s30, %s46
      %p48 = scmp.eq.s32.totalorder %s22, 0
      %p49 = por %p47, %p48
      %s50 = ssub.s32 %s16, %s23
      %p51 = scmp.eq.s32.totalorder %s50, 0
      %s53 = sadd.s32 %s52, 1
      %s54 = scalar_select %p51, %s52, %s53
      %p57 = pneg %p51
      %p58 = scmp.eq.s32.totalorder %s16, 1
      %p59 = por %p57, %p58
      %p60 = scmp.ne.s32.totalorder %s52, %s55
      %p61 = scmp.eq.s32.totalorder %s16, 0
      %p62 = por %p60, %p61
      %p63 = scmp.ne.s32.totalorder %s52, %s55
      %p64 = scmp.eq.s32.totalorder %s21, 1
      %p65 = por %p63, %p64
      %p66 = scmp.ne.s32.totalorder %s55, %s56
      %p67 = scmp.eq.s32.totalorder %s21, 0
      %p68 = por %p66, %p67
      %p69 = scmp.ne.s32.totalorder %s55, %s56
      %p70 = scmp.eq.s32.totalorder %s22, 1
      %p71 = por %p69, %p70
      %p73 = scmp.ne.s32.totalorder %s56, %s72
      %p74 = scmp.eq.s32.totalorder %s22, 0
      %p75 = por %p73, %p74
      %s77 = sadd.s32 %s76, 1
      %p80 = scmp.eq.s32.totalorder %s16, 1
      %p81 = scmp.ne.s32.totalorder %s76, %s78
      %p82 = scmp.eq.s32.totalorder %s16, 0
      %p83 = por %p81, %p82
      %p84 = scmp.ne.s32.totalorder %s76, %s78
      %p85 = scmp.eq.s32.totalorder %s21, 1
      %p86 = por %p84, %p85
      %p87 = scmp.ne.s32.totalorder %s78, %s79
      %p88 = scmp.eq.s32.totalorder %s21, 0
      %p89 = por %p87, %p88
      %p90 = scmp.ne.s32.totalorder %s78, %s79
      %p91 = scmp.eq.s32.totalorder %s22, 1
      %p92 = por %p90, %p91
      %p94 = scmp.ne.s32.totalorder %s79, %s93
      %p95 = scmp.eq.s32.totalorder %s22, 0
      %p96 = por %p94, %p95
      %s98 = sadd.s32 %s97, 1
      %p101 = scmp.eq.s32.totalorder %s16, 1
      %p102 = scmp.ne.s32.totalorder %s97, %s99
      %p103 = scmp.eq.s32.totalorder %s16, 0
      %p104 = por %p102, %p103
      %p105 = scmp.ne.s32.totalorder %s97, %s99
      %p106 = scmp.eq.s32.totalorder %s21, 1
      %p107 = por %p105, %p106
      %p108 = scmp.ne.s32.totalorder %s99, %s100
      %p109 = scmp.eq.s32.totalorder %s21, 0
      %p110 = por %p108, %p109
      %p111 = scmp.ne.s32.totalorder %s99, %s100
      %p112 = scmp.eq.s32.totalorder %s22, 1
      %p113 = por %p111, %p112
      %p115 = scmp.ne.s32.totalorder %s100, %s114
      %p116 = scmp.eq.s32.totalorder %s22, 0
      %p117 = por %p115, %p116
      %s119 = sadd.s32 %s118, 1
      %p122 = scmp.eq.s32.totalorder %s16, 1
      %p123 = scmp.ne.s32.totalorder %s118, %s120
      %p124 = scmp.eq.s32.totalorder %s16, 0
      %p125 = por %p123, %p124
      %p126 = scmp.ne.s32.totalorder %s118, %s120
      %p127 = scmp.eq.s32.totalorder %s21, 1
      %p128 = por %p126, %p127
      %p129 = scmp.ne.s32.totalorder %s120, %s121
      %p130 = scmp.eq.s32.totalorder %s21, 0
      %p131 = por %p129, %p130
      %p132 = scmp.ne.s32.totalorder %s120, %s121
      %p133 = scmp.eq.s32.totalorder %s22, 1
      %p134 = por %p132, %p133
      %p136 = scmp.ne.s32.totalorder %s121, %s135
      %p137 = scmp.eq.s32.totalorder %s22, 0
      %p138 = por %p136, %p137
      %s140 = sadd.s32 %s139, 1
      %p143 = scmp.eq.s32.totalorder %s16, 1
      %p144 = scmp.ne.s32.totalorder %s139, %s141
      %p145 = scmp.eq.s32.totalorder %s16, 0
      %p146 = por %p144, %p145
      %p147 = scmp.ne.s32.totalorder %s139, %s141
      %p148 = scmp.eq.s32.totalorder %s21, 1
      %p149 = por %p147, %p148
      %p150 = scmp.ne.s32.totalorder %s141, %s142
      %p151 = scmp.eq.s32.totalorder %s21, 0
      %p152 = por %p150, %p151
      %p153 = scmp.ne.s32.totalorder %s141, %s142
      %p154 = scmp.eq.s32.totalorder %s22, 1
      %p155 = por %p153, %p154
      %p157 = scmp.ne.s32.totalorder %s142, %s156
      %p158 = scmp.eq.s32.totalorder %s22, 0
      %p159 = por %p157, %p158
      %s161 = sadd.s32 %s160, 1
      %p164 = scmp.eq.s32.totalorder %s16, 1
      %p165 = scmp.ne.s32.totalorder %s160, %s162
      %p166 = scmp.eq.s32.totalorder %s16, 0
      %p167 = por %p165, %p166
      %p168 = scmp.ne.s32.totalorder %s160, %s162
      %p169 = scmp.eq.s32.totalorder %s21, 1
      %p170 = por %p168, %p169
      %p171 = scmp.ne.s32.totalorder %s162, %s163
      %p172 = scmp.eq.s32.totalorder %s21, 0
      %p173 = por %p171, %p172
      %p174 = scmp.ne.s32.totalorder %s162, %s163
      %p175 = scmp.eq.s32.totalorder %s22, 1
      %p176 = por %p174, %p175
      %p178 = scmp.ne.s32.totalorder %s163, %s177
      %p179 = scmp.eq.s32.totalorder %s22, 0
      %p180 = por %p178, %p179
      %s182 = sadd.s32 %s181, 1
      %p185 = scmp.eq.s32.totalorder %s16, 1
      %p186 = scmp.ne.s32.totalorder %s181, %s183
      %p187 = scmp.eq.s32.totalorder %s16, 0
      %p188 = por %p186, %p187
      %p189 = scmp.ne.s32.totalorder %s181, %s183
      %p190 = scmp.eq.s32.totalorder %s21, 1
      %p191 = por %p189, %p190
      %p192 = scmp.ne.s32.totalorder %s183, %s184
      %p193 = scmp.eq.s32.totalorder %s21, 0
      %p194 = por %p192, %p193
      %p195 = scmp.ne.s32.totalorder %s183, %s184
      %p196 = scmp.eq.s32.totalorder %s22, 1
      %p197 = por %p195, %p196
      %p199 = scmp.ne.s32.totalorder %s184, %s198
      %p200 = scmp.eq.s32.totalorder %s22, 0
      %p201 = por %p199, %p200
      %s202 = ssub.s32 %s16, %s23
      %p203 = scmp.eq.s32.totalorder %s202, 0
      %s205 = sadd.s32 %s204, 1
      %s206 = scalar_select %p203, %s204, %s205
      %p209 = pneg %p203
      %p210 = scmp.eq.s32.totalorder %s16, 1
      %p211 = por %p209, %p210
      %p212 = scmp.ne.s32.totalorder %s204, %s207
      %p213 = scmp.eq.s32.totalorder %s16, 0
      %p214 = por %p212, %p213
      %p215 = scmp.ne.s32.totalorder %s204, %s207
      %p216 = scmp.eq.s32.totalorder %s21, 1
      %p217 = por %p215, %p216
      %p218 = scmp.ne.s32.totalorder %s207, %s208
      %p219 = scmp.eq.s32.totalorder %s21, 0
      %p220 = por %p218, %p219
      %p221 = scmp.ne.s32.totalorder %s207, %s208
      %p222 = scmp.eq.s32.totalorder %s22, 1
      %p223 = por %p221, %p222
      %p225 = scmp.ne.s32.totalorder %s208, %s224
      %p226 = scmp.eq.s32.totalorder %s22, 0
      %p227 = por %p225, %p226
      %p228 = scmp.le.s32.totalorder 1, %s16
      %p229 = scmp.lt.s32.totalorder %s16, 3
      %p230 = pnand %p228, %p229
      %p231 = pneg %p230
      // Predicated region
      $region9: #{additive_coupling_forward.1} parent=5 // pred_check
        _
      $region10: #{additive_coupling_forward.1} parent=5 // pred_check_branch
        %233 = sbr.rel (%p230) target = $region12
      $region11: #{additive_coupling_forward.1} parent=5 // pred_region
        %s234 = ssub.s32 %s16, 1
        // Predicated region
        $region13: #{additive_coupling_forward.1} parent=11 // pred_check
          %p235 = pneg %p89
        $region14: #{additive_coupling_forward.1} parent=11 // pred_check_branch
          %237 = sbr.rel (%p235) target = $region16
        $region15: #{additive_coupling_forward.1} parent=11 // pred_region
          _
        $region16: #{additive_coupling_forward.1} parent=11 // pred_fallthru
          _
        // Predicated region
        $region17: #{additive_coupling_forward.1} parent=11 // pred_check
          %p238 = pneg %p110
        $region18: #{additive_coupling_forward.1} parent=11 // pred_check_branch
          %240 = sbr.rel (%p238) target = $region20
        $region19: #{additive_coupling_forward.1} parent=11 // pred_region
          _
        $region20: #{additive_coupling_forward.1} parent=11 // pred_fallthru
          _
        // Predicated region
        $region21: #{additive_coupling_forward.1} parent=11 // pred_check
          %p241 = pneg %p131
        $region22: #{additive_coupling_forward.1} parent=11 // pred_check_branch
          %243 = sbr.rel (%p241) target = $region24
        $region23: #{additive_coupling_forward.1} parent=11 // pred_region
          %s245 = ssub.s32 2048, 2048
          %246 = vsyncadd [#allocation3], %s245
          %s247 = sshll.u32 [#allocation2], 4
          %s248 = int_to_ptr.vmem [resolvable:$true] %s247
          %253 = dma.hbm_to_vmem [thread:$0]  %s4, 2048, %s248, [#allocation3], 128, 128, 8
        $region24: #{additive_coupling_forward.1} parent=11 // pred_fallthru
          _
        // Predicated region
        $region25: #{additive_coupling_forward.1} parent=11 // pred_check
          %p254 = pneg %p152
        $region26: #{additive_coupling_forward.1} parent=11 // pred_check_branch
          %256 = sbr.rel (%p254) target = $region28
        $region27: #{additive_coupling_forward.1} parent=11 // pred_region
          _
        $region28: #{additive_coupling_forward.1} parent=11 // pred_fallthru
          _
        // Predicated region
        $region29: #{additive_coupling_forward.1} parent=11 // pred_check
          %p257 = pneg %p173
        $region30: #{additive_coupling_forward.1} parent=11 // pred_check_branch
          %259 = sbr.rel (%p257) target = $region32
        $region31: #{additive_coupling_forward.1} parent=11 // pred_region
          %s261 = ssub.s32 2048, 2048
          %262 = vsyncadd [#allocation5], %s261
          %s263 = sshll.u32 [#allocation4], 4
          %s264 = int_to_ptr.vmem [resolvable:$true] %s263
          %269 = dma.hbm_to_vmem [thread:$0]  %s6, 2048, %s264, [#allocation5], 128, 128, 8
        $region32: #{additive_coupling_forward.1} parent=11 // pred_fallthru
          _
        // Predicated region
        $region33: #{additive_coupling_forward.1} parent=11 // pred_check
          %p270 = pneg %p194
        $region34: #{additive_coupling_forward.1} parent=11 // pred_check_branch
          %272 = sbr.rel (%p270) target = $region36
        $region35: #{additive_coupling_forward.1} parent=11 // pred_region
          _
        $region36: #{additive_coupling_forward.1} parent=11 // pred_fallthru
          _
      $region12: #{additive_coupling_forward.1} parent=5 // pred_fallthru
        _
      %p273 = scmp.lt.s32.totalorder %s16, 2
      // Predicated region
      $region37: #{additive_coupling_forward.1} parent=5 // pred_check
        %p274 = pneg %p273
      $region38: #{additive_coupling_forward.1} parent=5 // pred_check_branch
        %276 = sbr.rel (%p274) target = $region40
      $region39: #{additive_coupling_forward.1} parent=5 // pred_region
        // Predicated region
        $region41: #{additive_coupling_forward.1} parent=39 // pred_check
          %p277 = pneg %p36
        $region42: #{additive_coupling_forward.1} parent=39 // pred_check_branch
          %279 = sbr.rel (%p277) target = $region44
        $region43: #{additive_coupling_forward.1} parent=39 // pred_region
          %p280 = scmp.lt.s32.totalorder %s16, 1
          %s281 = scalar_select %p280, %s16, 1
          %s282 = smul.addr %s281, 8
          %s283 = scalar_lea.vmem %s0, %s282
        $region44: #{additive_coupling_forward.1} parent=39 // pred_fallthru
          _
        // Predicated region
        $region45: #{additive_coupling_forward.1} parent=39 // pred_check
          %p284 = pneg %p62
        $region46: #{additive_coupling_forward.1} parent=39 // pred_check_branch
          %286 = sbr.rel (%p284) target = $region48
        $region47: #{additive_coupling_forward.1} parent=39 // pred_region
          %p287 = scmp.lt.s32.totalorder %s16, 1
          %s288 = scalar_select %p287, %s16, 1
          %s289 = smul.addr %s288, 8
          %s290 = scalar_lea.vmem %s1, %s289
        $region48: #{additive_coupling_forward.1} parent=39 // pred_fallthru
          _
      $region40: #{additive_coupling_forward.1} parent=5 // pred_fallthru
        _
      %p291 = scmp.le.s32.totalorder 1, %s16
      %p292 = scmp.lt.s32.totalorder %s16, 3
      %p293 = pnand %p291, %p292
      %p294 = pneg %p293
      // Predicated region
      $region49: #{additive_coupling_forward.1} parent=5 // pred_check
        _
      $region50: #{additive_coupling_forward.1} parent=5 // pred_check_branch
        %296 = sbr.rel (%p293) target = $region52
      $region51: #{additive_coupling_forward.1} parent=5 // pred_region
        %s297 = ssub.s32 %s16, 1
        // Predicated region
        $region53: #{additive_coupling_forward.1} parent=51 // pred_check
          %p298 = pneg %p131
        $region54: #{additive_coupling_forward.1} parent=51 // pred_check_branch
          %300 = sbr.rel (%p298) target = $region56
        $region55: #{additive_coupling_forward.1} parent=51 // pred_region
          %301 = dma.done [#allocation3], 2048
        $region56: #{additive_coupling_forward.1} parent=51 // pred_fallthru
          _
        // Predicated region
        $region57: #{additive_coupling_forward.1} parent=51 // pred_check
          %p302 = pneg %p173
        $region58: #{additive_coupling_forward.1} parent=51 // pred_check_branch
          %304 = sbr.rel (%p302) target = $region60
        $region59: #{additive_coupling_forward.1} parent=51 // pred_region
          %305 = dma.done [#allocation5], 2048
        $region60: #{additive_coupling_forward.1} parent=51 // pred_fallthru
          _
        %p306 = scmp.lt.s32.totalorder %s21, 1
        %s307 = scalar_select %p306, %s21, 1
        %s308 = smul.addr %s307, 8
        %s309 = scalar_lea.vmem %s0, %s308
        %p310 = pneg %p42
        %p311 = pneg %p39
        %p312 = scmp.lt.s32.totalorder %s21, 1
        %s313 = scalar_select %p312, %s21, 1
        %s314 = smul.addr %s313, 8
        %s315 = scalar_lea.vmem %s1, %s314
        %p316 = pneg %p68
        %p317 = pneg %p65
        %p318 = pneg %p89
        %p319 = pneg %p86
        %p320 = pneg %p110
        %p321 = pneg %p107
        %p322 = pneg %p131
        %p323 = pneg %p128
        %p324 = pneg %p152
        %p325 = pneg %p149
        %p326 = pneg %p173
        %p327 = pneg %p170
        %p328 = pneg %p194
        %p329 = pneg %p191
        %p330 = pneg %p220
        %p331 = pneg %p217
        %p332 = scmp.lt.s32.totalorder %s21, 1
        %s333 = scalar_select %p332, %s21, 1
        %s334 = smul.addr %s333, 8
        %s335 = scalar_lea.vmem %s8, %s334
        %p336 = scmp.lt.s32.totalorder %s21, 1
        %s337 = scalar_select %p336, %s21, 1
        %s338 = smul.addr %s337, 8
        %s339 = scalar_lea.vmem %s0, %s338
        %p340 = scmp.lt.s32.totalorder %s21, 1
        %s341 = scalar_select %p340, %s21, 1
        %s342 = smul.addr %s341, 8
        %s343 = scalar_lea.vmem %s1, %s342
        %p344 = scmp.lt.s32.totalorder %s21, 1
        %s345 = scalar_select %p344, %s21, 1
        %s346 = smul.addr %s345, 8
        %s347 = scalar_lea.vmem %s8, %s346
        %v348 = vld [vmem:[%s339] sm:$0xff]
        %v349 = vld [vmem:[%s2] sm:$0xff]
        %v350 = vld [vmem:[%s2 + $0x8] sm:$0xff]
        %v351 = vld [vmem:[%s2 + $0x10] sm:$0xff]
        %v352 = vld [vmem:[%s2 + $0x18] sm:$0xff]
        %v353 = vld [vmem:[%s2 + $0x20] sm:$0xff]
        %v354 = vld [vmem:[%s2 + $0x28] sm:$0xff]
        %v355 = vld [vmem:[%s2 + $0x30] sm:$0xff]
        %v356 = vld [vmem:[%s2 + $0x38] sm:$0xff]
        %v357 = vld [vmem:[%s2 + $0x40] sm:$0xff]
        %v358 = vld [vmem:[%s2 + $0x48] sm:$0xff]
        %v359 = vld [vmem:[%s2 + $0x50] sm:$0xff]
        %v360 = vld [vmem:[%s2 + $0x58] sm:$0xff]
        %v361 = vld [vmem:[%s2 + $0x60] sm:$0xff]
        %v362 = vld [vmem:[%s2 + $0x68] sm:$0xff]
        %v363 = vld [vmem:[%s2 + $0x70] sm:$0xff]
        %v364 = vld [vmem:[%s2 + $0x78] sm:$0xff]
        %v365 = vld [vmem:[%s3] sm:$0x1]
        %v367 = vlaneseq
        %v368 = vshrl.u32 %v367, 7
        %v369 = vsub.s32 0, %v368
        %v370 = vrot.slane %v365, %v369
        %372 = vmatprep.subr.mxu0 0.0
        %373 = vmatpush1.msra.mxu0 %v364
        %374 = vmatprep.subr.mxu0 0.0
        %375 = vmatpush1.msra.mxu0 %v363
        %376 = vmatprep.subr.mxu0 0.0
        %377 = vmatpush1.msra.mxu0 %v362
        %378 = vmatprep.subr.mxu0 0.0
        %379 = vmatpush1.msra.mxu0 %v361
        %380 = vmatprep.subr.mxu0 0.0
        %381 = vmatpush1.msra.mxu0 %v360
        %382 = vmatprep.subr.mxu0 0.0
        %383 = vmatpush1.msra.mxu0 %v359
        %384 = vmatprep.subr.mxu0 0.0
        %385 = vmatpush1.msra.mxu0 %v358
        %386 = vmatprep.subr.mxu0 0.0
        %387 = vmatpush1.msra.mxu0 %v357
        %388 = vmatprep.subr.mxu0 0.0
        %389 = vmatpush1.msra.mxu0 %v356
        %390 = vmatprep.subr.mxu0 0.0
        %391 = vmatpush1.msra.mxu0 %v355
        %392 = vmatprep.subr.mxu0 0.0
        %393 = vmatpush1.msra.mxu0 %v354
        %394 = vmatprep.subr.mxu0 0.0
        %395 = vmatpush1.msra.mxu0 %v353
        %396 = vmatprep.subr.mxu0 0.0
        %397 = vmatpush1.msra.mxu0 %v352
        %398 = vmatprep.subr.mxu0 0.0
        %399 = vmatpush1.msra.mxu0 %v351
        %400 = vmatprep.subr.mxu0 0.0
        %401 = vmatpush1.msra.mxu0 %v350
        %402 = vmatprep.subr.mxu0 0.0
        %403 = vmatpush1.msra.mxu0 %v349
        %404 = vmatprep.subr.mxu0 0.0
        %405 = vmatpush2.msra.mxu0 0.0
        %406 = vmatprep.subr.mxu0 0.0
        %407 = vmatpush2.msra.mxu0 0.0
        %408 = vmatprep.subr.mxu0 0.0
        %409 = vmatpush2.msra.mxu0 0.0
        %410 = vmatprep.subr.mxu0 0.0
        %411 = vmatpush2.msra.mxu0 0.0
        %412 = vmatprep.subr.mxu0 0.0
        %413 = vmatpush2.msra.mxu0 0.0
        %414 = vmatprep.subr.mxu0 0.0
        %415 = vmatpush2.msra.mxu0 0.0
        %416 = vmatprep.subr.mxu0 0.0
        %417 = vmatpush2.msra.mxu0 0.0
        %418 = vmatprep.subr.mxu0 0.0
        %419 = vmatpush2.msra.mxu0 0.0
        %420 = vmatprep.subr.mxu0 0.0
        %421 = vmatpush2.msra.mxu0 0.0
        %422 = vmatprep.subr.mxu0 0.0
        %423 = vmatpush2.msra.mxu0 0.0
        %424 = vmatprep.subr.mxu0 0.0
        %425 = vmatpush2.msra.mxu0 0.0
        %426 = vmatprep.subr.mxu0 0.0
        %427 = vmatpush2.msra.mxu0 0.0
        %428 = vmatprep.subr.mxu0 0.0
        %429 = vmatpush2.msra.mxu0 0.0
        %430 = vmatprep.subr.mxu0 0.0
        %431 = vmatpush2.msra.mxu0 0.0
        %432 = vmatprep.subr.mxu0 0.0
        %433 = vmatpush2.msra.mxu0 0.0
        %434 = vmatprep.subr.mxu0 0.0
        %435 = vmatpush2.msra.mxu0 0.0
        %436 = vmatprep.mubr.f32.mxu0 0.0
        %437 = vmatmul.mubr.f32.gmra.mxu0 %v348
        %v438 = vpop.f32.mrf.mxu0
        %v439 = vadd.f32 %v370, %v438
        %v440 = vpop.f32.mrf.mxu0
        %441 = vdwg.mxu0
        %v442 = vmax.f32 %v439, 0.0
        %v443 = vld [vmem:[#allocation2] sm:$0xff]
        %v444 = vld [vmem:[#allocation2 + $0x8] sm:$0xff]
        %v445 = vld [vmem:[#allocation2 + $0x10] sm:$0xff]
        %v446 = vld [vmem:[#allocation2 + $0x18] sm:$0xff]
        %v447 = vld [vmem:[#allocation2 + $0x20] sm:$0xff]
        %v448 = vld [vmem:[#allocation2 + $0x28] sm:$0xff]
        %v449 = vld [vmem:[#allocation2 + $0x30] sm:$0xff]
        %v450 = vld [vmem:[#allocation2 + $0x38] sm:$0xff]
        %v451 = vld [vmem:[#allocation2 + $0x40] sm:$0xff]
        %v452 = vld [vmem:[#allocation2 + $0x48] sm:$0xff]
        %v453 = vld [vmem:[#allocation2 + $0x50] sm:$0xff]
        %v454 = vld [vmem:[#allocation2 + $0x58] sm:$0xff]
        %v455 = vld [vmem:[#allocation2 + $0x60] sm:$0xff]
        %v456 = vld [vmem:[#allocation2 + $0x68] sm:$0xff]
        %v457 = vld [vmem:[#allocation2 + $0x70] sm:$0xff]
        %v458 = vld [vmem:[#allocation2 + $0x78] sm:$0xff]
        %v459 = vld [vmem:[%s5] sm:$0x1]
        %v461 = vlaneseq
        %v462 = vshrl.u32 %v461, 7
        %v463 = vsub.s32 0, %v462
        %v464 = vrot.slane %v459, %v463
        %466 = vmatprep.subr.mxu0 0.0
        %467 = vmatpush1.msra.mxu0 %v458
        %468 = vmatprep.subr.mxu0 0.0
        %469 = vmatpush1.msra.mxu0 %v457
        %470 = vmatprep.subr.mxu0 0.0
        %471 = vmatpush1.msra.mxu0 %v456
        %472 = vmatprep.subr.mxu0 0.0
        %473 = vmatpush1.msra.mxu0 %v455
        %474 = vmatprep.subr.mxu0 0.0
        %475 = vmatpush1.msra.mxu0 %v454
        %476 = vmatprep.subr.mxu0 0.0
        %477 = vmatpush1.msra.mxu0 %v453
        %478 = vmatprep.subr.mxu0 0.0
        %479 = vmatpush1.msra.mxu0 %v452
        %480 = vmatprep.subr.mxu0 0.0
        %481 = vmatpush1.msra.mxu0 %v451
        %482 = vmatprep.subr.mxu0 0.0
        %483 = vmatpush1.msra.mxu0 %v450
        %484 = vmatprep.subr.mxu0 0.0
        %485 = vmatpush1.msra.mxu0 %v449
        %486 = vmatprep.subr.mxu0 0.0
        %487 = vmatpush1.msra.mxu0 %v448
        %488 = vmatprep.subr.mxu0 0.0
        %489 = vmatpush1.msra.mxu0 %v447
        %490 = vmatprep.subr.mxu0 0.0
        %491 = vmatpush1.msra.mxu0 %v446
        %492 = vmatprep.subr.mxu0 0.0
        %493 = vmatpush1.msra.mxu0 %v445
        %494 = vmatprep.subr.mxu0 0.0
        %495 = vmatpush1.msra.mxu0 %v444
        %496 = vmatprep.subr.mxu0 0.0
        %497 = vmatpush1.msra.mxu0 %v443
        %498 = vmatprep.subr.mxu0 0.0
        %499 = vmatpush2.msra.mxu0 0.0
        %500 = vmatprep.subr.mxu0 0.0
        %501 = vmatpush2.msra.mxu0 0.0
        %502 = vmatprep.subr.mxu0 0.0
        %503 = vmatpush2.msra.mxu0 0.0
        %504 = vmatprep.subr.mxu0 0.0
        %505 = vmatpush2.msra.mxu0 0.0
        %506 = vmatprep.subr.mxu0 0.0
        %507 = vmatpush2.msra.mxu0 0.0
        %508 = vmatprep.subr.mxu0 0.0
        %509 = vmatpush2.msra.mxu0 0.0
        %510 = vmatprep.subr.mxu0 0.0
        %511 = vmatpush2.msra.mxu0 0.0
        %512 = vmatprep.subr.mxu0 0.0
        %513 = vmatpush2.msra.mxu0 0.0
        %514 = vmatprep.subr.mxu0 0.0
        %515 = vmatpush2.msra.mxu0 0.0
        %516 = vmatprep.subr.mxu0 0.0
        %517 = vmatpush2.msra.mxu0 0.0
        %518 = vmatprep.subr.mxu0 0.0
        %519 = vmatpush2.msra.mxu0 0.0
        %520 = vmatprep.subr.mxu0 0.0
        %521 = vmatpush2.msra.mxu0 0.0
        %522 = vmatprep.subr.mxu0 0.0
        %523 = vmatpush2.msra.mxu0 0.0
        %524 = vmatprep.subr.mxu0 0.0
        %525 = vmatpush2.msra.mxu0 0.0
        %526 = vmatprep.subr.mxu0 0.0
        %527 = vmatpush2.msra.mxu0 0.0
        %528 = vmatprep.subr.mxu0 0.0
        %529 = vmatpush2.msra.mxu0 0.0
        %530 = vmatprep.mubr.f32.mxu0 0.0
        %531 = vmatmul.mubr.f32.gmra.mxu0 %v442
        %v532 = vpop.f32.mrf.mxu0
        %v533 = vadd.f32 %v464, %v532
        %v534 = vpop.f32.mrf.mxu0
        %535 = vdwg.mxu0
        %v536 = vmax.f32 %v533, 0.0
        %v537 = vld [vmem:[#allocation4] sm:$0xff]
        %v538 = vld [vmem:[#allocation4 + $0x8] sm:$0xff]
        %v539 = vld [vmem:[#allocation4 + $0x10] sm:$0xff]
        %v540 = vld [vmem:[#allocation4 + $0x18] sm:$0xff]
        %v541 = vld [vmem:[#allocation4 + $0x20] sm:$0xff]
        %v542 = vld [vmem:[#allocation4 + $0x28] sm:$0xff]
        %v543 = vld [vmem:[#allocation4 + $0x30] sm:$0xff]
        %v544 = vld [vmem:[#allocation4 + $0x38] sm:$0xff]
        %v545 = vld [vmem:[#allocation4 + $0x40] sm:$0xff]
        %v546 = vld [vmem:[#allocation4 + $0x48] sm:$0xff]
        %v547 = vld [vmem:[#allocation4 + $0x50] sm:$0xff]
        %v548 = vld [vmem:[#allocation4 + $0x58] sm:$0xff]
        %v549 = vld [vmem:[#allocation4 + $0x60] sm:$0xff]
        %v550 = vld [vmem:[#allocation4 + $0x68] sm:$0xff]
        %v551 = vld [vmem:[#allocation4 + $0x70] sm:$0xff]
        %v552 = vld [vmem:[#allocation4 + $0x78] sm:$0xff]
        %v553 = vld [vmem:[%s7] sm:$0x1]
        %v555 = vlaneseq
        %v556 = vshrl.u32 %v555, 7
        %v557 = vsub.s32 0, %v556
        %v558 = vrot.slane %v553, %v557
        %560 = vmatprep.subr.mxu0 0.0
        %561 = vmatpush1.msra.mxu0 %v552
        %562 = vmatprep.subr.mxu0 0.0
        %563 = vmatpush1.msra.mxu0 %v551
        %564 = vmatprep.subr.mxu0 0.0
        %565 = vmatpush1.msra.mxu0 %v550
        %566 = vmatprep.subr.mxu0 0.0
        %567 = vmatpush1.msra.mxu0 %v549
        %568 = vmatprep.subr.mxu0 0.0
        %569 = vmatpush1.msra.mxu0 %v548
        %570 = vmatprep.subr.mxu0 0.0
        %571 = vmatpush1.msra.mxu0 %v547
        %572 = vmatprep.subr.mxu0 0.0
        %573 = vmatpush1.msra.mxu0 %v546
        %574 = vmatprep.subr.mxu0 0.0
        %575 = vmatpush1.msra.mxu0 %v545
        %576 = vmatprep.subr.mxu0 0.0
        %577 = vmatpush1.msra.mxu0 %v544
        %578 = vmatprep.subr.mxu0 0.0
        %579 = vmatpush1.msra.mxu0 %v543
        %580 = vmatprep.subr.mxu0 0.0
        %581 = vmatpush1.msra.mxu0 %v542
        %582 = vmatprep.subr.mxu0 0.0
        %583 = vmatpush1.msra.mxu0 %v541
        %584 = vmatprep.subr.mxu0 0.0
        %585 = vmatpush1.msra.mxu0 %v540
        %586 = vmatprep.subr.mxu0 0.0
        %587 = vmatpush1.msra.mxu0 %v539
        %588 = vmatprep.subr.mxu0 0.0
        %589 = vmatpush1.msra.mxu0 %v538
        %590 = vmatprep.subr.mxu0 0.0
        %591 = vmatpush1.msra.mxu0 %v537
        %592 = vmatprep.subr.mxu0 0.0
        %593 = vmatpush2.msra.mxu0 0.0
        %594 = vmatprep.subr.mxu0 0.0
        %595 = vmatpush2.msra.mxu0 0.0
        %596 = vmatprep.subr.mxu0 0.0
        %597 = vmatpush2.msra.mxu0 0.0
        %598 = vmatprep.subr.mxu0 0.0
        %599 = vmatpush2.msra.mxu0 0.0
        %600 = vmatprep.subr.mxu0 0.0
        %601 = vmatpush2.msra.mxu0 0.0
        %602 = vmatprep.subr.mxu0 0.0
        %603 = vmatpush2.msra.mxu0 0.0
        %604 = vmatprep.subr.mxu0 0.0
        %605 = vmatpush2.msra.mxu0 0.0
        %606 = vmatprep.subr.mxu0 0.0
        %607 = vmatpush2.msra.mxu0 0.0
        %608 = vmatprep.subr.mxu0 0.0
        %609 = vmatpush2.msra.mxu0 0.0
        %610 = vmatprep.subr.mxu0 0.0
        %611 = vmatpush2.msra.mxu0 0.0
        %612 = vmatprep.subr.mxu0 0.0
        %613 = vmatpush2.msra.mxu0 0.0
        %614 = vmatprep.subr.mxu0 0.0
        %615 = vmatpush2.msra.mxu0 0.0
        %616 = vmatprep.subr.mxu0 0.0
        %617 = vmatpush2.msra.mxu0 0.0
        %618 = vmatprep.subr.mxu0 0.0
        %619 = vmatpush2.msra.mxu0 0.0
        %620 = vmatprep.subr.mxu0 0.0
        %621 = vmatpush2.msra.mxu0 0.0
        %622 = vmatprep.subr.mxu0 0.0
        %623 = vmatpush2.msra.mxu0 0.0
        %624 = vmatprep.mubr.f32.mxu0 0.0
        %625 = vmatmul.mubr.f32.gmra.mxu0 %v536
        %v626 = vpop.f32.mrf.mxu0
        %v627 = vadd.f32 %v558, %v626
        %v628 = vpop.f32.mrf.mxu0
        %629 = vdwg.mxu0
        %v630 = vld [vmem:[%s343] sm:$0xff]
        %v631 = vadd.f32 %v630, %v627
        %632 = vst [vmem:[%s347] sm:$0xff] %v631
        %p633 = scmp.lt.s32.totalorder %s21, 1
        %s634 = scalar_select %p633, %s21, 1
        %s635 = smul.addr %s634, 8
        %s636 = scalar_lea.vmem %s8, %s635
        // Predicated region
        $region61: #{additive_coupling_forward.1} parent=51 // pred_check
          %p637 = pneg %p217
        $region62: #{additive_coupling_forward.1} parent=51 // pred_check_branch
          %639 = sbr.rel (%p637) target = $region64
        $region63: #{additive_coupling_forward.1} parent=51 // pred_region
          _
        $region64: #{additive_coupling_forward.1} parent=51 // pred_fallthru
          _
      $region52: #{additive_coupling_forward.1} parent=5 // pred_fallthru
        _
      %p640 = scmp.le.s32.totalorder 2, %s16
      // Predicated region
      $region65: #{additive_coupling_forward.1} parent=5 // pred_check
        %p641 = pneg %p640
      $region66: #{additive_coupling_forward.1} parent=5 // pred_check_branch
        %643 = sbr.rel (%p641) target = $region68
      $region67: #{additive_coupling_forward.1} parent=5 // pred_region
        %s644 = ssub.s32 %s16, 2
        // Predicated region
        $region69: #{additive_coupling_forward.1} parent=67 // pred_check
          %p645 = pneg %p223
        $region70: #{additive_coupling_forward.1} parent=67 // pred_check_branch
          %647 = sbr.rel (%p645) target = $region72
        $region71: #{additive_coupling_forward.1} parent=67 // pred_region
          %p648 = scmp.lt.s32.totalorder %s22, 1
          %s649 = scalar_select %p648, %s22, 1
          %s650 = smul.addr %s649, 8
          %s651 = scalar_lea.vmem %s8, %s650
        $region72: #{additive_coupling_forward.1} parent=67 // pred_fallthru
          _
      $region68: #{additive_coupling_forward.1} parent=5 // pred_fallthru
        _
    $region6: #{additive_coupling_forward.1} parent=1 // loop_footer
      %s20 = sadd.s32 1, %s16
    $region7: #{additive_coupling_forward.1} parent=1 // loop_footer_branch
      %15 = sbr.rel target = $region3
    $region8: #{additive_coupling_forward.1} parent=1 // loop_exit
      _
    %652 = vsyncpa [#allocation3], 1
    %s653 = scalar_lea.sflag [#allocation3], 1
    %654 = vsyncpa %s653, 1
    %655 = vsyncpa [#allocation5], 1

</llo_original>
